<compile_context>
chip_gen: v7x
topology: tpu7x:2x2x1
jax: 0.10.0
libtpu: 0.0.40
codegen_flags: <defaults>
</compile_context>

<pallas_src>
import jax
import jax.numpy as jnp
from jax.experimental import pallas as pl
from jax.experimental.pallas import tpu as pltpu


# ----------------------------------------------------------------------------
# Shared recurrent core (used by both the sequence and the single-step kernel)
# ----------------------------------------------------------------------------
def _gru_core(xpre, h, wh12, wrh):
    """One recurrence step given the precomputed input projection.

    xpre : (B, 3H) f32 = x @ [Wx1^T|Wx2^T|Wx3^T] + [bx1+bh1|bx2+bh2|bx3+brh]
    h    : (B, H)  f32
    wh12 : (H, 2H) compute dtype = [Wh1^T | Wh2^T]
    wrh  : (H, H)  compute dtype = Wrh^T
    """
    H = h.shape[-1]
    cdt = wh12.dtype
    pre12 = xpre[:, :2 * H] + jnp.dot(
        h.astype(cdt), wh12, preferred_element_type=jnp.float32)
    # r first, then immediately issue the dependent (r*h)@Wrh MXU push so it
    # overlaps the remaining EUP (sigmoid/tanh) work.
    r = jax.nn.sigmoid(pre12[:, :H])
    rh = jnp.dot((r * h).astype(cdt), wrh, preferred_element_type=jnp.float32)
    z = jax.nn.sigmoid(pre12[:, H:])
    htilde = jnp.tanh(xpre[:, 2 * H:] + rh)
    return htilde + z * (h - htilde)  # == z*h + (1-z)*htilde


# ----------------------------------------------------------------------------
# Kernels
# ----------------------------------------------------------------------------
def _gru_v3_seq_kernel(xpre_ref, h0_ref, wh12_ref, wrh_ref, hseq_ref, h_scr):
    """grid=(T,). Weights have constant block indices (VMEM-resident);
    hidden state carried across steps in the h_scr VMEM scratch."""
    @pl.when(pl.program_id(0) == 0)
    def _():
        h_scr[...] = h0_ref[...]

    h_new = _gru_core(xpre_ref[0], h_scr[...], wh12_ref[...], wrh_ref[...])
    h_scr[...] = h_new
    hseq_ref[0] = h_new.astype(hseq_ref.dtype)


def _gru_v3_step_kernel(x_ref, h_ref, wx_ref, wh12_ref, wrh_ref, b_ref, o_ref):
    """Single forward() step (module-equivalent API)."""
    cdt = wx_ref.dtype
    xpre = jnp.dot(x_ref[...].astype(cdt), wx_ref[...],
                   preferred_element_type=jnp.float32) + b_ref[...]
    h_new = _gru_core(xpre, h_ref[...], wh12_ref[...], wrh_ref[...])
    o_ref[...] = h_new.astype(o_ref.dtype)


# ----------------------------------------------------------------------------
# One-time parameter packing (hoisted out of the hot path)
# ----------------------------------------------------------------------------
def prepare_params(params, compute_dtype=jnp.float32):
    """Pack PyTorch-layout params into fused kernel operands.

    params: wx1,wx2,wx3 (H,I); wh1,wh2,wrh (H,H); bx1..brh (H,).
    Returns:
      wx_f (I, 3H)  [compute_dtype]  = [Wx1^T | Wx2^T | Wx3^T]
      wh12 (H, 2H)  [compute_dtype]  = [Wh1^T | Wh2^T]        (no zero block)
      wrh  (H, H)   [compute_dtype]  = Wrh^T
      b_f  (1, 3H)  [f32]            = [bx1+bh1 | bx2+bh2 | bx3+brh]
    """
    H = params["wx1"].shape[0]
    wx_f = jnp.concatenate(
        [params["wx1"].T, params["wx2"].T, params["wx3"].T],
        axis=1).astype(compute_dtype)
    wh12 = jnp.concatenate(
        [params["wh1"].T, params["wh2"].T], axis=1).astype(compute_dtype)
    wrh = params["wrh"].T.astype(compute_dtype)
    b_f = jnp.concatenate([
        params["bx1"] + params["bh1"],
        params["bx2"] + params["bh2"],
        params["bx3"] + params["brh"],
    ]).reshape(1, 3 * H).astype(jnp.float32)
    return {"wx_f": wx_f, "wh12": wh12, "wrh": wrh, "b_f": b_f}


# ----------------------------------------------------------------------------
# Wrappers
# ----------------------------------------------------------------------------
def my_noisy_gru_v3_sequence(x_seq, h0, packed):
    """Run the cell over a whole sequence inside one pallas_call.

    x_seq: (T, B, I); h0: (B, H).  Returns (T, B, H): h after each step.
    """
    T, B, _ = x_seq.shape
    H = h0.shape[1]
    assert H % 128 == 0, "gate slices must stay lane-aligned; pad H to 128"

    cdt = packed["wh12"].dtype
    # Hoisted, time-parallel input projection: one big (T*B, I)x(I, 3H) matmul
    # in XLA with biases pre-folded; the recurrent kernel then only runs the
    # two small serial matmuls per step.
    xpre = (jnp.dot(x_seq.reshape(T * B, -1).astype(cdt), packed["wx_f"],
                    preferred_element_type=jnp.float32)
            + packed["b_f"]).reshape(T, B, 3 * H)

    grid_spec = pltpu.PrefetchScalarGridSpec(
        num_scalar_prefetch=0,
        grid=(T,),
        in_specs=[
            # Per-step input-projection tile (double-buffered by Pallas).
            pl.BlockSpec((1, B, 3 * H), lambda t: (t, 0, 0)),
            # Constant block indices -> DMA'd once, VMEM-resident for all T.
            pl.BlockSpec((B, H), lambda t: (0, 0)),
            pl.BlockSpec((H, 2 * H), lambda t: (0, 0)),
            pl.BlockSpec((H, H), lambda t: (0, 0)),
        ],
        out_specs=pl.BlockSpec((1, B, H), lambda t: (t, 0, 0)),
        scratch_shapes=[pltpu.VMEM((B, H), jnp.float32)],  # carried hidden
    )
    return pl.pallas_call(
        _gru_v3_seq_kernel,
        out_shape=jax.ShapeDtypeStruct((T, B, H), jnp.float32),
        grid_spec=grid_spec,
        compiler_params=pltpu.CompilerParams(
            dimension_semantics=("arbitrary",)),  # recurrence: serial in time
    )(xpre, h0, packed["wh12"], packed["wrh"])


def my_noisy_gru_v3_cell(x, state, packed):
    """Single cell step (PyTorch forward equivalent). `packed` from prepare_params."""
    B = x.shape[0]
    H = state.shape[1]
    vmem = pl.BlockSpec(memory_space=pltpu.MemorySpace.VMEM)
    args = (x, state, packed["wx_f"], packed["wh12"], packed["wrh"],
            packed["b_f"])
    return pl.pallas_call(
        _gru_v3_step_kernel,
        out_shape=jax.ShapeDtypeStruct((B, H), jnp.float32),
        in_specs=[vmem] * len(args),
        out_specs=vmem,
        input_output_aliases={1: 0},  # reuse the state HBM buffer for output
    )(*args)


# ----------------------------------------------------------------------------
# Deterministic init + pure-JAX reference (mirrors the PyTorch forward)
# ----------------------------------------------------------------------------
def init_params(key, input_size, hidden_size):
    """PyTorch-Linear-style init: U(-1/sqrt(fan_in), 1/sqrt(fan_in))."""
    keys = jax.random.split(key, 12)

    def uni(k, shape, fan_in):
        bound = 1.0 / jnp.sqrt(fan_in)
        return jax.random.uniform(k, shape, jnp.float32, -bound, bound)

    I, H = input_size, hidden_size
    return {
        "wx1": uni(keys[0], (H, I), I), "bx1": uni(keys[1], (H,), I),
        "wx2": uni(keys[2], (H, I), I), "bx2": uni(keys[3], (H,), I),
        "wx3": uni(keys[4], (H, I), I), "bx3": uni(keys[5], (H,), I),
        "wh1": uni(keys[6], (H, H), H), "bh1": uni(keys[7], (H,), H),
        "wh2": uni(keys[8], (H, H), H), "bh2": uni(keys[9], (H,), H),
        "wrh": uni(keys[10], (H, H), H), "brh": uni(keys[11], (H,), H),
    }


def _reference(x, h, p):
    lin = lambda v, w, b: v @ w.T + b
    r = jax.nn.sigmoid(lin(x, p["wx1"], p["bx1"]) + lin(h, p["wh1"], p["bh1"]))
    z = jax.nn.sigmoid(lin(x, p["wx2"], p["bx2"]) + lin(h, p["wh2"], p["bh2"]))
    htilde = jnp.tanh(lin(x, p["wx3"], p["bx3"]) + lin(r * h, p["wrh"], p["brh"]))
    return z * h + (1.0 - z) * htilde


def _reference_sequence(x_seq, h0, p):
    def step(h, x):
        h_new = _reference(x, h, p)
        return h_new, h_new
    _, hs = jax.lax.scan(step, h0, x_seq)
    return hs


# ----------------------------------------------------------------------------
# Demo / correctness check
# ----------------------------------------------------------------------------
if __name__ == "__main__":
    T, B, INPUT_SIZE, HIDDEN_SIZE = 16, 8, 16, 128

    key = jax.random.PRNGKey(0)
    k_x, k_h, k_p = jax.random.split(key, 3)

    x_seq = jax.random.normal(k_x, (T, B, INPUT_SIZE), jnp.float32)
    h0 = jax.random.normal(k_h, (B, HIDDEN_SIZE), jnp.float32)
    params = init_params(k_p, INPUT_SIZE, HIDDEN_SIZE)

    # One-time packing (hoisted out of the hot path).
    packed_f32 = prepare_params(params, compute_dtype=jnp.float32)
    packed_bf16 = prepare_params(params, compute_dtype=jnp.bfloat16)

    seq_fn = jax.jit(my_noisy_gru_v3_sequence)
    step_fn = jax.jit(my_noisy_gru_v3_cell)

    ref_seq = _reference_sequence(x_seq, h0, params)

    # 1) Full-sequence kernel, f32 weights: tight check vs PyTorch-equivalent ref.
    out_f32 = jax.block_until_ready(seq_fn(x_seq, h0, packed_f32))
    assert out_f32.shape == (T, B, HIDDEN_SIZE)
    assert jnp.allclose(out_f32, ref_seq, atol=1e-4, rtol=1e-4), \
        "f32 sequence mismatch vs reference"

    # 2) Full-sequence kernel, bf16 recurrent weights (perf-recommended path):
    #    tolerance loosened for bf16 operand rounding compounded over T steps.
    out_bf16 = jax.block_until_ready(seq_fn(x_seq, h0, packed_bf16))
    assert jnp.allclose(out_bf16, ref_seq, atol=1e-1, rtol=1e-1), \
        "bf16 sequence mismatch vs reference"

    # 3) Single-step API (module forward equivalent), state aliased to output.
    out_step = jax.block_until_ready(step_fn(x_seq[0], h0, packed_f32))
    ref_step = _reference(x_seq[0], h0, params)
    assert jnp.allclose(out_step, ref_step, atol=5e-5, rtol=5e-5), \
        "single-step mismatch vs reference"
    assert jnp.allclose(out_step, out_f32[0], atol=5e-5, rtol=5e-5), \
        "single-step disagrees with sequence step 0"

    print("KERNEL_OK")
</pallas_src>

<mosaic_0001>
module attributes {stable_mosaic.version = 11 : i64} {
  func.func @_gru_v3_seq_kernel(%arg0: i32, %arg1: memref<1x8x384xf32, #tpu.memory_space<vmem>>, %arg2: memref<8x128xf32, #tpu.memory_space<vmem>>, %arg3: memref<128x256xf32, #tpu.memory_space<vmem>>, %arg4: memref<128x128xf32, #tpu.memory_space<vmem>>, %arg5: memref<1x8x128xf32, #tpu.memory_space<vmem>>, %arg6: memref<8x128xf32, #tpu.memory_space<vmem>>) attributes {dimension_semantics = [#tpu.dimension_semantics<arbitrary>], iteration_bounds = array<i64: 16>, scalar_prefetch = 0 : i64, scratch_operands = 1 : i64, tpu.core_type = #tpu.core_type<tc>, window_params = [{transform_indices = @transform_0, window_bounds = array<i64: 1, 8, 384>}, {pipeline_mode = #tpu.pipeline_mode<synchronous>, transform_indices = @transform_1, window_bounds = array<i64: 8, 128>}, {pipeline_mode = #tpu.pipeline_mode<synchronous>, transform_indices = @transform_2, window_bounds = array<i64: 128, 256>}, {pipeline_mode = #tpu.pipeline_mode<synchronous>, transform_indices = @transform_3, window_bounds = array<i64: 128, 128>}, {transform_indices = @transform_4, window_bounds = array<i64: 1, 8, 128>}]} {
    %c0_i32 = arith.constant 0 : i32
    %0 = arith.cmpi eq, %arg0, %c0_i32 : i32
    %1 = arith.extui %0 : i1 to i32
    %c0_i32_0 = arith.constant 0 : i32
    %2 = arith.cmpi ne, %1, %c0_i32_0 : i32
    scf.if %2 {
      %c0_17 = arith.constant 0 : index
      %c0_18 = arith.constant 0 : index
      %35 = vector.load %arg2[%c0_17, %c0_18] : memref<8x128xf32, #tpu.memory_space<vmem>>, vector<8x128xf32>
      %c0_19 = arith.constant 0 : index
      %c0_20 = arith.constant 0 : index
      %36 = vector.load %arg6[%c0_19, %c0_20] : memref<8x128xf32, #tpu.memory_space<vmem>>, vector<8x128xf32>
      tpu.vector_store %arg6[%c0_19, %c0_20], %35 {strides = array<i32>} : memref<8x128xf32, #tpu.memory_space<vmem>>, vector<8x128xf32>,
    } else {
    }
    %c0 = arith.constant 0 : index
    %c0_1 = arith.constant 0 : index
    %c0_2 = arith.constant 0 : index
    %3 = vector.load %arg1[%c0, %c0_1, %c0_2] : memref<1x8x384xf32, #tpu.memory_space<vmem>>, vector<1x8x384xf32>
    %4 = vector.shape_cast %3 : vector<1x8x384xf32> to vector<8x384xf32>
    %c0_3 = arith.constant 0 : index
    %c0_4 = arith.constant 0 : index
    %5 = vector.load %arg6[%c0_3, %c0_4] : memref<8x128xf32, #tpu.memory_space<vmem>>, vector<8x128xf32>
    %c0_5 = arith.constant 0 : index
    %c0_6 = arith.constant 0 : index
    %6 = vector.load %arg3[%c0_5, %c0_6] : memref<128x256xf32, #tpu.memory_space<vmem>>, vector<128x256xf32>
    %c0_7 = arith.constant 0 : index
    %c0_8 = arith.constant 0 : index
    %7 = vector.load %arg4[%c0_7, %c0_8] : memref<128x128xf32, #tpu.memory_space<vmem>>, vector<128x128xf32>
    %8 = vector.extract_strided_slice %4 {offsets = [0, 0], sizes = [8, 256], strides = [1, 1]} : vector<8x384xf32> to vector<8x256xf32>
    %cst = arith.constant dense<0.000000e+00> : vector<8x256xf32>
    %9 = tpu.matmul %5, %6, %cst {dimension_numbers = #tpu.dot_dimension_numbers<[1], [0], [0], [1], [0, 0, 1, 1], [], []>} : vector<8x128xf32>, vector<128x256xf32>, vector<8x256xf32> -> vector<8x256xf32>
    %10 = arith.addf %8, %9 : vector<8x256xf32>
    %11 = vector.extract_strided_slice %10 {offsets = [0, 0], sizes = [8, 128], strides = [1, 1]} : vector<8x256xf32> to vector<8x128xf32>
    %12 = arith.negf %11 : vector<8x128xf32>
    %13 = math.exp %12 : vector<8x128xf32>
    %cst_9 = arith.constant 1.000000e+00 : f32
    %14 = vector.broadcast %cst_9 : f32 to vector<8x128xf32>
    %15 = arith.addf %14, %13 : vector<8x128xf32>
    %16 = arith.divf %14, %15 : vector<8x128xf32>
    %17 = arith.mulf %16, %5 : vector<8x128xf32>
    %cst_10 = arith.constant dense<0.000000e+00> : vector<8x128xf32>
    %18 = tpu.matmul %17, %7, %cst_10 {dimension_numbers = #tpu.dot_dimension_numbers<[1], [0], [0], [1], [0, 0, 1, 1], [], []>} : vector<8x128xf32>, vector<128x128xf32>, vector<8x128xf32> -> vector<8x128xf32>
    %19 = vector.extract_strided_slice %10 {offsets = [0, 128], sizes = [8, 128], strides = [1, 1]} : vector<8x256xf32> to vector<8x128xf32>
    %20 = arith.negf %19 : vector<8x128xf32>
    %21 = math.exp %20 : vector<8x128xf32>
    %cst_11 = arith.constant 1.000000e+00 : f32
    %22 = vector.broadcast %cst_11 : f32 to vector<8x128xf32>
    %23 = arith.addf %22, %21 : vector<8x128xf32>
    %24 = arith.divf %22, %23 : vector<8x128xf32>
    %25 = vector.extract_strided_slice %4 {offsets = [0, 256], sizes = [8, 128], strides = [1, 1]} : vector<8x384xf32> to vector<8x128xf32>
    %26 = arith.addf %25, %18 : vector<8x128xf32>
    %27 = math.tanh %26 : vector<8x128xf32>
    %28 = arith.subf %5, %27 : vector<8x128xf32>
    %29 = arith.mulf %24, %28 : vector<8x128xf32>
    %30 = arith.addf %27, %29 : vector<8x128xf32>
    %c0_12 = arith.constant 0 : index
    %c0_13 = arith.constant 0 : index
    %31 = vector.load %arg6[%c0_12, %c0_13] : memref<8x128xf32, #tpu.memory_space<vmem>>, vector<8x128xf32>
    tpu.vector_store %arg6[%c0_12, %c0_13], %30 {strides = array<i32>} : memref<8x128xf32, #tpu.memory_space<vmem>>, vector<8x128xf32>,
    %c0_14 = arith.constant 0 : index
    %c0_15 = arith.constant 0 : index
    %c0_16 = arith.constant 0 : index
    %32 = vector.load %arg5[%c0_14, %c0_15, %c0_16] : memref<1x8x128xf32, #tpu.memory_space<vmem>>, vector<1x8x128xf32>
    %33 = vector.shape_cast %32 : vector<1x8x128xf32> to vector<8x128xf32>
    %34 = vector.shape_cast %30 : vector<8x128xf32> to vector<1x8x128xf32>
    tpu.vector_store %arg5[%c0_14, %c0_15, %c0_16], %34 {strides = array<i32>} : memref<1x8x128xf32, #tpu.memory_space<vmem>>, vector<1x8x128xf32>,
    return
  }
  func.func @transform_0(%arg0: i32) -> (i32, i32, i32) {
    %c0_i32 = arith.constant 0 : i32
    %c0_i32_0 = arith.constant 0 : i32
    %c0_i32_1 = arith.constant 0 : i32
    return %arg0, %c0_i32, %c0_i32_0 : i32, i32, i32
  }
  func.func @transform_1(%arg0: i32) -> (i32, i32) {
    %c0_i32 = arith.constant 0 : i32
    %c0_i32_0 = arith.constant 0 : i32
    %c0_i32_1 = arith.constant 0 : i32
    return %c0_i32, %c0_i32_0 : i32, i32
  }
  func.func @transform_2(%arg0: i32) -> (i32, i32) {
    %c0_i32 = arith.constant 0 : i32
    %c0_i32_0 = arith.constant 0 : i32
    %c0_i32_1 = arith.constant 0 : i32
    return %c0_i32, %c0_i32_0 : i32, i32
  }
  func.func @transform_3(%arg0: i32) -> (i32, i32) {
    %c0_i32 = arith.constant 0 : i32
    %c0_i32_0 = arith.constant 0 : i32
    %c0_i32_1 = arith.constant 0 : i32
    return %c0_i32, %c0_i32_0 : i32, i32
  }
  func.func @transform_4(%arg0: i32) -> (i32, i32, i32) {
    %c0_i32 = arith.constant 0 : i32
    %c0_i32_0 = arith.constant 0 : i32
    %c0_i32_1 = arith.constant 0 : i32
    return %arg0, %c0_i32, %c0_i32_0 : i32, i32, i32
  }
}

</mosaic_0001>

<llo_original>
// kernel: my_noisy_gru_v3_sequence.1
$region0: #{my_noisy_gru_v3_sequence.1}
  #allocation0 [shape = 'u32[]', space=smem, size = 0x4, offset = 0x4, fixed_abs, tag = 'smem constant byte address 0x4 - core index']
  #allocation1 [shape = 'u32[144,128]{1,0:T(1,128)}', space=vmem, size = 0x12000, scoped, tag = 'internal scratch']
  #allocation2 [shape = 'f32[8,128]{1,0:T(8,128)}', space=vmem, size = 0x1000, scoped, tag = 'scratch operand']
  %s0 = inlined_call_operand.vmem [shape: f32[16,8,384], index: 0, kind: input, shape index: {}]
  %s1 = inlined_call_operand.vmem [shape: f32[8,128], index: 1, kind: input, shape index: {}]
  %s2 = inlined_call_operand.vmem [shape: f32[128,256], index: 2, kind: input, shape index: {}]
  %s3 = inlined_call_operand.vmem [shape: f32[128,128], index: 3, kind: input, shape index: {}]
  %s4 = inlined_call_operand.hbm [shape: f32[16,8,128], index: 4, kind: output, shape index: {}]
  %s5 = sld [smem:[#allocation0]]
  $region53: #{my_noisy_gru_v3_sequence.1} parent=0
    _
  %s7 = ssub.s32 1, %s5
  %s8 = scalar_select 0, %s7, %s5
  $region1: #{my_noisy_gru_v3_sequence.1} parent=0
    #allocation3 [shape = 'u8[8192]{0}', space=vmem, size = 0x2000, scoped, tag = 'output window, operand 0']
    #allocation4 [shape = 's32[2]{0}', space=sflag, size = 0x8, scoped, tag = 'scoped memory for my_noisy_gru_v3_sequence.1']
    %9 = vsyncpa [#allocation4], 0
    %s10 = scalar_lea.sflag [#allocation4], 1
    %11 = vsyncpa %s10, 0
    loop: start=0, step=1, limit=18
    $region2: #{my_noisy_gru_v3_sequence.1} parent=1 // loop_pre_header
      _
    $region3: #{my_noisy_gru_v3_sequence.1} parent=1 // loop_header
      %s13 = sphi 0, %s17
      %p14 = scmp.ge.s32.totalorder %s13, 18
      %s23 = sphi 0, %s25
      %s26 = sphi 0, %s23
      %s27 = sphi 0, %s26
      %s43 = sphi 0, %s27
      %s47 = sphi 0, %s47
      %s49 = sphi 0, %s47
      %s50 = sphi 0, %s49
      %s64 = sphi 0, %s50
      %s68 = sphi 0, %s68
      %s70 = sphi 0, %s68
      %s71 = sphi 0, %s70
      %s85 = sphi 0, %s71
      %s89 = sphi 0, %s89
      %s91 = sphi 0, %s89
      %s92 = sphi 0, %s91
      %s106 = sphi 0, %s92
      %s112 = sphi 0, %s114
      %s115 = sphi 0, %s112
      %s116 = sphi 0, %s115
      %s132 = sphi 0, %s116
    $region4: #{my_noisy_gru_v3_sequence.1} parent=1 // loop_header_branch
      %16 = sbr.rel (%p14) target = $region8
    $region5: #{my_noisy_gru_v3_sequence.1} parent=1 // loop_body
      %s18 = ssub.s32 %s13, 1
      %s19 = ssub.s32 %s13, 2
      %s20 = sadd.s32 %s13, 1
      %s21 = ssub.s32 %s13, %s20
      %p22 = scmp.eq.s32.totalorder %s21, 0
      %s24 = sadd.s32 %s23, 1
      %s25 = scalar_select %p22, %s23, %s24
      %p28 = pneg %p22
      %p29 = scmp.eq.s32.totalorder %s13, 15
      %p30 = por %p28, %p29
      %p31 = scmp.ne.s32.totalorder %s23, %s26
      %p32 = scmp.eq.s32.totalorder %s13, 0
      %p33 = por %p31, %p32
      %p34 = scmp.ne.s32.totalorder %s23, %s26
      %p35 = scmp.eq.s32.totalorder %s18, 15
      %p36 = por %p34, %p35
      %p37 = scmp.ne.s32.totalorder %s26, %s27
      %p38 = scmp.eq.s32.totalorder %s18, 0
      %p39 = por %p37, %p38
      %p40 = scmp.ne.s32.totalorder %s26, %s27
      %p41 = scmp.eq.s32.totalorder %s19, 15
      %p42 = por %p40, %p41
      %p44 = scmp.ne.s32.totalorder %s27, %s43
      %p45 = scmp.eq.s32.totalorder %s19, 0
      %p46 = por %p44, %p45
      %s48 = sadd.s32 %s47, 1
      %p51 = scmp.eq.s32.totalorder %s13, 15
      %p52 = scmp.ne.s32.totalorder %s47, %s49
      %p53 = scmp.eq.s32.totalorder %s13, 0
      %p54 = por %p52, %p53
      %p55 = scmp.ne.s32.totalorder %s47, %s49
      %p56 = scmp.eq.s32.totalorder %s18, 15
      %p57 = por %p55, %p56
      %p58 = scmp.ne.s32.totalorder %s49, %s50
      %p59 = scmp.eq.s32.totalorder %s18, 0
      %p60 = por %p58, %p59
      %p61 = scmp.ne.s32.totalorder %s49, %s50
      %p62 = scmp.eq.s32.totalorder %s19, 15
      %p63 = por %p61, %p62
      %p65 = scmp.ne.s32.totalorder %s50, %s64
      %p66 = scmp.eq.s32.totalorder %s19, 0
      %p67 = por %p65, %p66
      %s69 = sadd.s32 %s68, 1
      %p72 = scmp.eq.s32.totalorder %s13, 15
      %p73 = scmp.ne.s32.totalorder %s68, %s70
      %p74 = scmp.eq.s32.totalorder %s13, 0
      %p75 = por %p73, %p74
      %p76 = scmp.ne.s32.totalorder %s68, %s70
      %p77 = scmp.eq.s32.totalorder %s18, 15
      %p78 = por %p76, %p77
      %p79 = scmp.ne.s32.totalorder %s70, %s71
      %p80 = scmp.eq.s32.totalorder %s18, 0
      %p81 = por %p79, %p80
      %p82 = scmp.ne.s32.totalorder %s70, %s71
      %p83 = scmp.eq.s32.totalorder %s19, 15
      %p84 = por %p82, %p83
      %p86 = scmp.ne.s32.totalorder %s71, %s85
      %p87 = scmp.eq.s32.totalorder %s19, 0
      %p88 = por %p86, %p87
      %s90 = sadd.s32 %s89, 1
      %p93 = scmp.eq.s32.totalorder %s13, 15
      %p94 = scmp.ne.s32.totalorder %s89, %s91
      %p95 = scmp.eq.s32.totalorder %s13, 0
      %p96 = por %p94, %p95
      %p97 = scmp.ne.s32.totalorder %s89, %s91
      %p98 = scmp.eq.s32.totalorder %s18, 15
      %p99 = por %p97, %p98
      %p100 = scmp.ne.s32.totalorder %s91, %s92
      %p101 = scmp.eq.s32.totalorder %s18, 0
      %p102 = por %p100, %p101
      %p103 = scmp.ne.s32.totalorder %s91, %s92
      %p104 = scmp.eq.s32.totalorder %s19, 15
      %p105 = por %p103, %p104
      %p107 = scmp.ne.s32.totalorder %s92, %s106
      %p108 = scmp.eq.s32.totalorder %s19, 0
      %p109 = por %p107, %p108
      %s110 = ssub.s32 %s13, %s20
      %p111 = scmp.eq.s32.totalorder %s110, 0
      %s113 = sadd.s32 %s112, 1
      %s114 = scalar_select %p111, %s112, %s113
      %p117 = pneg %p111
      %p118 = scmp.eq.s32.totalorder %s13, 15
      %p119 = por %p117, %p118
      %p120 = scmp.ne.s32.totalorder %s112, %s115
      %p121 = scmp.eq.s32.totalorder %s13, 0
      %p122 = por %p120, %p121
      %p123 = scmp.ne.s32.totalorder %s112, %s115
      %p124 = scmp.eq.s32.totalorder %s18, 15
      %p125 = por %p123, %p124
      %p126 = scmp.ne.s32.totalorder %s115, %s116
      %p127 = scmp.eq.s32.totalorder %s18, 0
      %p128 = por %p126, %p127
      %p129 = scmp.ne.s32.totalorder %s115, %s116
      %p130 = scmp.eq.s32.totalorder %s19, 15
      %p131 = por %p129, %p130
      %p133 = scmp.ne.s32.totalorder %s116, %s132
      %p134 = scmp.eq.s32.totalorder %s19, 0
      %p135 = por %p133, %p134
      %p136 = scmp.le.s32.totalorder 1, %s13
      %p137 = scmp.lt.s32.totalorder %s13, 17
      %p138 = pnand %p136, %p137
      %p139 = pneg %p138
      // Predicated region
      $region9: #{my_noisy_gru_v3_sequence.1} parent=5 // pred_check
        _
      $region10: #{my_noisy_gru_v3_sequence.1} parent=5 // pred_check_branch
        %141 = sbr.rel (%p138) target = $region12
      $region11: #{my_noisy_gru_v3_sequence.1} parent=5 // pred_region
        %s142 = ssub.s32 %s13, 1
        // Predicated region
        $region13: #{my_noisy_gru_v3_sequence.1} parent=11 // pred_check
          %p143 = pneg %p60
        $region14: #{my_noisy_gru_v3_sequence.1} parent=11 // pred_check_branch
          %145 = sbr.rel (%p143) target = $region16
        $region15: #{my_noisy_gru_v3_sequence.1} parent=11 // pred_region
          _
        $region16: #{my_noisy_gru_v3_sequence.1} parent=11 // pred_fallthru
          _
        // Predicated region
        $region17: #{my_noisy_gru_v3_sequence.1} parent=11 // pred_check
          %p146 = pneg %p81
        $region18: #{my_noisy_gru_v3_sequence.1} parent=11 // pred_check_branch
          %148 = sbr.rel (%p146) target = $region20
        $region19: #{my_noisy_gru_v3_sequence.1} parent=11 // pred_region
          _
        $region20: #{my_noisy_gru_v3_sequence.1} parent=11 // pred_fallthru
          _
        // Predicated region
        $region21: #{my_noisy_gru_v3_sequence.1} parent=11 // pred_check
          %p149 = pneg %p102
        $region22: #{my_noisy_gru_v3_sequence.1} parent=11 // pred_check_branch
          %151 = sbr.rel (%p149) target = $region24
        $region23: #{my_noisy_gru_v3_sequence.1} parent=11 // pred_region
          _
        $region24: #{my_noisy_gru_v3_sequence.1} parent=11 // pred_fallthru
          _
      $region12: #{my_noisy_gru_v3_sequence.1} parent=5 // pred_fallthru
        _
      %p152 = scmp.lt.s32.totalorder %s13, 16
      // Predicated region
      $region25: #{my_noisy_gru_v3_sequence.1} parent=5 // pred_check
        %p153 = pneg %p152
      $region26: #{my_noisy_gru_v3_sequence.1} parent=5 // pred_check_branch
        %155 = sbr.rel (%p153) target = $region28
      $region27: #{my_noisy_gru_v3_sequence.1} parent=5 // pred_region
        // Predicated region
        $region29: #{my_noisy_gru_v3_sequence.1} parent=27 // pred_check
          %p156 = pneg %p33
        $region30: #{my_noisy_gru_v3_sequence.1} parent=27 // pred_check_branch
          %158 = sbr.rel (%p156) target = $region32
        $region31: #{my_noisy_gru_v3_sequence.1} parent=27 // pred_region
          %p159 = scmp.lt.s32.totalorder %s13, 15
          %s160 = scalar_select %p159, %s13, 15
          %s161 = smul.addr %s160, 3
          %s162 = smul.addr %s161, 8
          %s163 = scalar_lea.vmem %s0, %s162
        $region32: #{my_noisy_gru_v3_sequence.1} parent=27 // pred_fallthru
          _
      $region28: #{my_noisy_gru_v3_sequence.1} parent=5 // pred_fallthru
        _
      %p164 = scmp.le.s32.totalorder 1, %s13
      %p165 = scmp.lt.s32.totalorder %s13, 17
      %p166 = pnand %p164, %p165
      %p167 = pneg %p166
      // Predicated region
      $region33: #{my_noisy_gru_v3_sequence.1} parent=5 // pred_check
        _
      $region34: #{my_noisy_gru_v3_sequence.1} parent=5 // pred_check_branch
        %169 = sbr.rel (%p166) target = $region36
      $region35: #{my_noisy_gru_v3_sequence.1} parent=5 // pred_region
        %s170 = ssub.s32 %s13, 1
        %p171 = scmp.lt.s32.totalorder %s18, 15
        %s172 = scalar_select %p171, %s18, 15
        %s173 = smul.addr %s172, 3
        %s174 = smul.addr %s173, 8
        %s175 = scalar_lea.vmem %s0, %s174
        %p176 = pneg %p39
        %p177 = pneg %p36
        %p178 = pneg %p60
        %p179 = pneg %p57
        %p180 = pneg %p81
        %p181 = pneg %p78
        %p182 = pneg %p102
        %p183 = pneg %p99
        %p184 = pneg %p128
        %p185 = pneg %p125
        %s186 = sand.u32 %s115, 1
        %s187 = scalar_lea.sflag [#allocation4], %s186
        %s188 = sand.u32 %s115, 1
        %s189 = smul.addr %s188, 8
        %s190 = scalar_lea.vmem [#allocation3], %s189
        %p191 = scmp.lt.s32.totalorder %s18, 15
        %s192 = scalar_select %p191, %s18, 15
        %s193 = smul.addr %s192, 3
        %s194 = smul.addr %s193, 8
        %s195 = scalar_lea.vmem %s0, %s194
        %p196 = scmp.eq.s32.totalorder %s18, 0
        // Predicated region
        $region37: #{my_noisy_gru_v3_sequence.1} parent=35 // pred_check
          %p197 = pneg %p196
        $region38: #{my_noisy_gru_v3_sequence.1} parent=35 // pred_check_branch
          %199 = sbr.rel (%p197) target = $region40
        $region39: #{my_noisy_gru_v3_sequence.1} parent=35 // pred_region
          %v200 = vld [vmem:[%s1] sm:$0xff]
          %201 = vst [vmem:[#allocation2] sm:$0xff] %v200
        $region40: #{my_noisy_gru_v3_sequence.1} parent=35 // pred_fallthru
          _
        %v202 = vld [vmem:[%s195] sm:$0xff]
        %v203 = vld [vmem:[%s195 + $0x8] sm:$0xff]
        %v204 = vld [vmem:[%s195 + $0x10] sm:$0xff]
        %v205 = vld [vmem:[#allocation2] sm:$0xff]
        %v206 = vld [vmem:[%s2] sm:$0xff]
        %v207 = vld [vmem:[%s2 + $0x8] sm:$0xff]
        %v208 = vld [vmem:[%s2 + $0x10] sm:$0xff]
        %v209 = vld [vmem:[%s2 + $0x18] sm:$0xff]
        %v210 = vld [vmem:[%s2 + $0x20] sm:$0xff]
        %v211 = vld [vmem:[%s2 + $0x28] sm:$0xff]
        %v212 = vld [vmem:[%s2 + $0x30] sm:$0xff]
        %v213 = vld [vmem:[%s2 + $0x38] sm:$0xff]
        %v214 = vld [vmem:[%s2 + $0x40] sm:$0xff]
        %v215 = vld [vmem:[%s2 + $0x48] sm:$0xff]
        %v216 = vld [vmem:[%s2 + $0x50] sm:$0xff]
        %v217 = vld [vmem:[%s2 + $0x58] sm:$0xff]
        %v218 = vld [vmem:[%s2 + $0x60] sm:$0xff]
        %v219 = vld [vmem:[%s2 + $0x68] sm:$0xff]
        %v220 = vld [vmem:[%s2 + $0x70] sm:$0xff]
        %v221 = vld [vmem:[%s2 + $0x78] sm:$0xff]
        %v222 = vld [vmem:[%s2 + $0x80] sm:$0xff]
        %v223 = vld [vmem:[%s2 + $0x88] sm:$0xff]
        %v224 = vld [vmem:[%s2 + $0x90] sm:$0xff]
        %v225 = vld [vmem:[%s2 + $0x98] sm:$0xff]
        %v226 = vld [vmem:[%s2 + $0xa0] sm:$0xff]
        %v227 = vld [vmem:[%s2 + $0xa8] sm:$0xff]
        %v228 = vld [vmem:[%s2 + $0xb0] sm:$0xff]
        %v229 = vld [vmem:[%s2 + $0xb8] sm:$0xff]
        %v230 = vld [vmem:[%s2 + $0xc0] sm:$0xff]
        %v231 = vld [vmem:[%s2 + $0xc8] sm:$0xff]
        %v232 = vld [vmem:[%s2 + $0xd0] sm:$0xff]
        %v233 = vld [vmem:[%s2 + $0xd8] sm:$0xff]
        %v234 = vld [vmem:[%s2 + $0xe0] sm:$0xff]
        %v235 = vld [vmem:[%s2 + $0xe8] sm:$0xff]
        %v236 = vld [vmem:[%s2 + $0xf0] sm:$0xff]
        %v237 = vld [vmem:[%s2 + $0xf8] sm:$0xff]
        %v238 = vld [vmem:[%s3] sm:$0xff]
        %v239 = vld [vmem:[%s3 + $0x8] sm:$0xff]
        %v240 = vld [vmem:[%s3 + $0x10] sm:$0xff]
        %v241 = vld [vmem:[%s3 + $0x18] sm:$0xff]
        %v242 = vld [vmem:[%s3 + $0x20] sm:$0xff]
        %v243 = vld [vmem:[%s3 + $0x28] sm:$0xff]
        %v244 = vld [vmem:[%s3 + $0x30] sm:$0xff]
        %v245 = vld [vmem:[%s3 + $0x38] sm:$0xff]
        %v246 = vld [vmem:[%s3 + $0x40] sm:$0xff]
        %v247 = vld [vmem:[%s3 + $0x48] sm:$0xff]
        %v248 = vld [vmem:[%s3 + $0x50] sm:$0xff]
        %v249 = vld [vmem:[%s3 + $0x58] sm:$0xff]
        %v250 = vld [vmem:[%s3 + $0x60] sm:$0xff]
        %v251 = vld [vmem:[%s3 + $0x68] sm:$0xff]
        %v252 = vld [vmem:[%s3 + $0x70] sm:$0xff]
        %v253 = vld [vmem:[%s3 + $0x78] sm:$0xff]
        %254 = vmatprep.subr.mxu0 %v207
        %255 = vmatpush1.msra.mxu0 %v206
        %256 = vmatprep.subr.mxu0 %v209
        %257 = vmatpush1.msra.mxu0 %v208
        %258 = vmatprep.subr.mxu0 %v211
        %259 = vmatpush1.msra.mxu0 %v210
        %260 = vmatprep.subr.mxu0 %v213
        %261 = vmatpush1.msra.mxu0 %v212
        %262 = vmatprep.subr.mxu0 %v215
        %263 = vmatpush1.msra.mxu0 %v214
        %264 = vmatprep.subr.mxu0 %v217
        %265 = vmatpush1.msra.mxu0 %v216
        %266 = vmatprep.subr.mxu0 %v219
        %267 = vmatpush1.msra.mxu0 %v218
        %268 = vmatprep.subr.mxu0 %v221
        %269 = vmatpush1.msra.mxu0 %v220
        %270 = vmatprep.subr.mxu0 %v223
        %271 = vmatpush1.msra.mxu0 %v222
        %272 = vmatprep.subr.mxu0 %v225
        %273 = vmatpush1.msra.mxu0 %v224
        %274 = vmatprep.subr.mxu0 %v227
        %275 = vmatpush1.msra.mxu0 %v226
        %276 = vmatprep.subr.mxu0 %v229
        %277 = vmatpush1.msra.mxu0 %v228
        %278 = vmatprep.subr.mxu0 %v231
        %279 = vmatpush1.msra.mxu0 %v230
        %280 = vmatprep.subr.mxu0 %v233
        %281 = vmatpush1.msra.mxu0 %v232
        %282 = vmatprep.subr.mxu0 %v235
        %283 = vmatpush1.msra.mxu0 %v234
        %284 = vmatprep.subr.mxu0 %v237
        %285 = vmatpush1.msra.mxu0 %v236
        %286 = vmatprep.subr.mxu0 0.0
        %287 = vmatpush1.msra.mxu0 0.0
        %288 = vmatprep.subr.mxu0 0.0
        %289 = vmatpush1.msra.mxu0 0.0
        %290 = vmatprep.subr.mxu0 0.0
        %291 = vmatpush1.msra.mxu0 0.0
        %292 = vmatprep.subr.mxu0 0.0
        %293 = vmatpush1.msra.mxu0 0.0
        %294 = vmatprep.subr.mxu0 0.0
        %295 = vmatpush1.msra.mxu0 0.0
        %296 = vmatprep.subr.mxu0 0.0
        %297 = vmatpush1.msra.mxu0 0.0
        %298 = vmatprep.subr.mxu0 0.0
        %299 = vmatpush1.msra.mxu0 0.0
        %300 = vmatprep.subr.mxu0 0.0
        %301 = vmatpush1.msra.mxu0 0.0
        %302 = vmatprep.subr.mxu0 0.0
        %303 = vmatpush1.msra.mxu0 0.0
        %304 = vmatprep.subr.mxu0 0.0
        %305 = vmatpush1.msra.mxu0 0.0
        %306 = vmatprep.subr.mxu0 0.0
        %307 = vmatpush1.msra.mxu0 0.0
        %308 = vmatprep.subr.mxu0 0.0
        %309 = vmatpush1.msra.mxu0 0.0
        %310 = vmatprep.subr.mxu0 0.0
        %311 = vmatpush1.msra.mxu0 0.0
        %312 = vmatprep.subr.mxu0 0.0
        %313 = vmatpush1.msra.mxu0 0.0
        %314 = vmatprep.subr.mxu0 0.0
        %315 = vmatpush1.msra.mxu0 0.0
        %316 = vmatprep.subr.mxu0 0.0
        %317 = vmatpush1.msra.mxu0 0.0
        %318 = vmatprep.mubr.f32.mxu0 0.0
        %319 = vmatmul.mubr.f32.gmra.mrb[0].mxu0 %v205
        %v320 = vpop.f32.mrb[0].mxu0
        %v321 = vadd.f32 0.0, %v320
        %v322 = vpop.f32.mrb[0].mxu0
        %v323 = vadd.f32 0.0, %v322
        %324 = vdwg.mxu0
        %v325 = vadd.f32 %v202, %v321
        %v326 = vadd.f32 %v203, %v323
        %v327 = vxor.u32 %v325, 2147483648
        %v328 = vmul.f32 %v327, 1.442695
        %v329 = vpow.pop %v328
        %v330 = vadd.f32 %v329, 1.0
        %v331 = vrcp.pop %v330
        %v332 = vmul.f32 1.0, %v331
        %v333 = vmul.f32 %v332, %v205
        %334 = vmatprep.subr.mxu0 0.0
        %335 = vmatpush1.msra.mxu0 %v238
        %336 = vmatprep.subr.mxu0 0.0
        %337 = vmatpush1.msra.mxu0 %v239
        %338 = vmatprep.subr.mxu0 0.0
        %339 = vmatpush1.msra.mxu0 %v240
        %340 = vmatprep.subr.mxu0 0.0
        %341 = vmatpush1.msra.mxu0 %v241
        %342 = vmatprep.subr.mxu0 0.0
        %343 = vmatpush1.msra.mxu0 %v242
        %344 = vmatprep.subr.mxu0 0.0
        %345 = vmatpush1.msra.mxu0 %v243
        %346 = vmatprep.subr.mxu0 0.0
        %347 = vmatpush1.msra.mxu0 %v244
        %348 = vmatprep.subr.mxu0 0.0
        %349 = vmatpush1.msra.mxu0 %v245
        %350 = vmatprep.subr.mxu0 0.0
        %351 = vmatpush1.msra.mxu0 %v246
        %352 = vmatprep.subr.mxu0 0.0
        %353 = vmatpush1.msra.mxu0 %v247
        %354 = vmatprep.subr.mxu0 0.0
        %355 = vmatpush1.msra.mxu0 %v248
        %356 = vmatprep.subr.mxu0 0.0
        %357 = vmatpush1.msra.mxu0 %v249
        %358 = vmatprep.subr.mxu0 0.0
        %359 = vmatpush1.msra.mxu0 %v250
        %360 = vmatprep.subr.mxu0 0.0
        %361 = vmatpush1.msra.mxu0 %v251
        %362 = vmatprep.subr.mxu0 0.0
        %363 = vmatpush1.msra.mxu0 %v252
        %364 = vmatprep.subr.mxu0 0.0
        %365 = vmatpush1.msra.mxu0 %v253
        %366 = vmatprep.subr.mxu0 0.0
        %367 = vmatpush1.msra.mxu0 0.0
        %368 = vmatprep.subr.mxu0 0.0
        %369 = vmatpush1.msra.mxu0 0.0
        %370 = vmatprep.subr.mxu0 0.0
        %371 = vmatpush1.msra.mxu0 0.0
        %372 = vmatprep.subr.mxu0 0.0
        %373 = vmatpush1.msra.mxu0 0.0
        %374 = vmatprep.subr.mxu0 0.0
        %375 = vmatpush1.msra.mxu0 0.0
        %376 = vmatprep.subr.mxu0 0.0
        %377 = vmatpush1.msra.mxu0 0.0
        %378 = vmatprep.subr.mxu0 0.0
        %379 = vmatpush1.msra.mxu0 0.0
        %380 = vmatprep.subr.mxu0 0.0
        %381 = vmatpush1.msra.mxu0 0.0
        %382 = vmatprep.subr.mxu0 0.0
        %383 = vmatpush1.msra.mxu0 0.0
        %384 = vmatprep.subr.mxu0 0.0
        %385 = vmatpush1.msra.mxu0 0.0
        %386 = vmatprep.subr.mxu0 0.0
        %387 = vmatpush1.msra.mxu0 0.0
        %388 = vmatprep.subr.mxu0 0.0
        %389 = vmatpush1.msra.mxu0 0.0
        %390 = vmatprep.subr.mxu0 0.0
        %391 = vmatpush1.msra.mxu0 0.0
        %392 = vmatprep.subr.mxu0 0.0
        %393 = vmatpush1.msra.mxu0 0.0
        %394 = vmatprep.subr.mxu0 0.0
        %395 = vmatpush1.msra.mxu0 0.0
        %396 = vmatprep.subr.mxu0 0.0
        %397 = vmatpush1.msra.mxu0 0.0
        %398 = vmatprep.mubr.f32.mxu0 0.0
        %399 = vmatmul.mubr.f32.gmra.mrb[0].mxu0 %v333
        %v400 = vpop.f32.mrb[0].mxu0
        %v401 = vadd.f32 0.0, %v400
        %v402 = vpop.f32.mrb[0].mxu0
        %403 = vdwg.mxu0
        %v404 = vxor.u32 %v326, 2147483648
        %v405 = vmul.f32 %v404, 1.442695
        %v406 = vpow.pop %v405
        %v407 = vadd.f32 %v406, 1.0
        %v408 = vrcp.pop %v407
        %v409 = vmul.f32 1.0, %v408
        %v410 = vadd.f32 %v204, %v401
        %v411 = vtanh.pop %v410
        %v412 = vsub.f32 %v205, %v411
        %v413 = vmul.f32 %v409, %v412
        %v414 = vadd.f32 %v411, %v413
        %415 = vst [vmem:[#allocation2] sm:$0xff] %v414
        %416 = vst [vmem:[%s190] sm:$0xff] %v414
        %s417 = sand.u32 %s115, 1
        %s418 = scalar_lea.sflag [#allocation4], %s417
        %s419 = sand.u32 %s115, 1
        %s420 = smul.addr %s419, 8
        %s421 = scalar_lea.vmem [#allocation3], %s420
        // Predicated region
        $region41: #{my_noisy_gru_v3_sequence.1} parent=35 // pred_check
          %p422 = pneg %p125
        $region42: #{my_noisy_gru_v3_sequence.1} parent=35 // pred_check_branch
          %424 = sbr.rel (%p422) target = $region44
        $region43: #{my_noisy_gru_v3_sequence.1} parent=35 // pred_region
          %s426 = ssub.s32 128, 128
          %427 = vsyncadd %s418, %s426
          %s428 = smul.addr %s18, 128
          %s429 = scalar_lea.hbm %s4, %s428
          %s431 = sshll.u32 %s421, 4
          %s432 = int_to_ptr.vmem [resolvable:$true] %s431
          %434 = dma.vmem_to_hbm [thread:$0]  %s432, 128, %s429, %s418
        $region44: #{my_noisy_gru_v3_sequence.1} parent=35 // pred_fallthru
          _
      $region36: #{my_noisy_gru_v3_sequence.1} parent=5 // pred_fallthru
        _
      %p435 = scmp.le.s32.totalorder 2, %s13
      // Predicated region
      $region45: #{my_noisy_gru_v3_sequence.1} parent=5 // pred_check
        %p436 = pneg %p435
      $region46: #{my_noisy_gru_v3_sequence.1} parent=5 // pred_check_branch
        %438 = sbr.rel (%p436) target = $region48
      $region47: #{my_noisy_gru_v3_sequence.1} parent=5 // pred_region
        %s439 = ssub.s32 %s13, 2
        // Predicated region
        $region49: #{my_noisy_gru_v3_sequence.1} parent=47 // pred_check
          %p440 = pneg %p131
        $region50: #{my_noisy_gru_v3_sequence.1} parent=47 // pred_check_branch
          %442 = sbr.rel (%p440) target = $region52
        $region51: #{my_noisy_gru_v3_sequence.1} parent=47 // pred_region
          %s443 = sand.u32 %s116, 1
          %s444 = scalar_lea.sflag [#allocation4], %s443
          %s445 = sand.u32 %s116, 1
          %s446 = smul.addr %s445, 8
          %s447 = scalar_lea.vmem [#allocation3], %s446
          %448 = dma.done %s444, 128
        $region52: #{my_noisy_gru_v3_sequence.1} parent=47 // pred_fallthru
          _
      $region48: #{my_noisy_gru_v3_sequence.1} parent=5 // pred_fallthru
        _
    $region6: #{my_noisy_gru_v3_sequence.1} parent=1 // loop_footer
      %s17 = sadd.s32 1, %s13
    $region7: #{my_noisy_gru_v3_sequence.1} parent=1 // loop_footer_branch
      %12 = sbr.rel target = $region3
    $region8: #{my_noisy_gru_v3_sequence.1} parent=1 // loop_exit
      _
    %449 = vsyncpa [#allocation4], 1
    %s450 = scalar_lea.sflag [#allocation4], 1
    %451 = vsyncpa %s450, 1

</llo_original>
